<compile_context>
chip_gen: v5e
topology: v5e:2x2
jax: 0.10.0
libtpu: 0.0.40
codegen_flags: <defaults>
</compile_context>

<pallas_src>
import jax
import jax.numpy as jnp
from jax.experimental import pallas as pl
from jax.experimental.pallas import tpu as pltpu


def _addcoords_concat_kernel(x_ref, coords_ref, o_ref):
    # x_ref      : (1, C,       TILE)  input channels for one (batch, spatial tile)
    # coords_ref : (1, extra,   TILE)  precomputed coordinate channels (batch-invariant)
    # o_ref      : (1, C+extra, TILE)
    C = x_ref.shape[1]
    o_ref[:, :C, :] = x_ref[...]
    o_ref[:, C:, :] = coords_ref[...]


def _coord_channels(H, W, extra, dtype):
    """Batch-invariant coordinate channels, flattened to (1, extra, H*W).

    Matches the PyTorch reference exactly: xx varies along the x_dim (H) axis,
    yy along the y_dim (W) axis, both scaled to [-1, 1] via /(dim-1)*2-1.
    (H==1 or W==1 yields inf, same as the PyTorch module.)
    """
    xx = jnp.arange(H, dtype=jnp.float32) / jnp.float32(H - 1) * 2.0 - 1.0
    yy = jnp.arange(W, dtype=jnp.float32) / jnp.float32(W - 1) * 2.0 - 1.0
    xx_hw = jnp.broadcast_to(xx[:, None], (H, W)).astype(dtype)
    yy_hw = jnp.broadcast_to(yy[None, :], (H, W)).astype(dtype)
    chans = [xx_hw, yy_hw]
    if extra == 3:
        rr = jnp.sqrt((xx_hw - 0.5) ** 2 + (yy_hw - 0.5) ** 2).astype(dtype)
        chans.append(rr)
    return jnp.stack(chans, axis=0).reshape(1, extra, H * W)


def _pick_spatial_tile(HW, C, C_out, extra, itemsize):
    """Choose a lane tile along the flattened H*W axis.

    Budget: double-buffered (input + coords + output) blocks must stay well
    under the smallest scoped-VMEM default (16 MiB on v5e; 32 MiB on v6e/v7x)
    so the pipeline never degrades, independent of H, W, C.
    """
    budget = 12 * 1024 * 1024
    c_pad = -(-C // 8) * 8          # sublane padding of the channel dim
    e_pad = -(-extra // 8) * 8
    o_pad = -(-C_out // 8) * 8
    per_lane = 2 * (c_pad + e_pad + o_pad) * itemsize   # x2: double buffering
    max_tile = max(budget // per_lane, 128)
    max_tile = min(max_tile, 8192)                      # plenty past HBM roofline
    if HW <= max_tile:
        return HW, 1                                    # one full-width block (no 128 constraint)
    tile = (max_tile // 128) * 128                      # lane-aligned tile; last block may be partial
    return tile, pl.cdiv(HW, tile)


def add_coords(x: jax.Array, with_r: bool = False) -> jax.Array:
    """Pallas implementation of AddCoords.forward for NCHW inputs."""
    B, C, H, W = x.shape
    extra = 3 if with_r else 2
    C_out = C + extra
    HW = H * W
    dtype = x.dtype
    itemsize = jnp.dtype(dtype).itemsize

    coords = _coord_channels(H, W, extra, dtype)        # (1, extra, HW), tiny
    x_flat = x.reshape(B, C, HW)                        # lane-dense layout

    tile, n_tiles = _pick_spatial_tile(HW, C, C_out, extra, itemsize)

    # Pure bandwidth: read input + coords, write concatenated output. ~0 flops.
    bytes_accessed = itemsize * (B * C * HW + B * extra * HW + B * C_out * HW)

    out_flat = pl.pallas_call(
        _addcoords_concat_kernel,
        out_shape=jax.ShapeDtypeStruct((B, C_out, HW), dtype),
        grid_spec=pltpu.PrefetchScalarGridSpec(
            num_scalar_prefetch=0,
            grid=(B, n_tiles),
            in_specs=[
                pl.BlockSpec((1, C, tile), lambda b, t: (b, 0, t)),
                pl.BlockSpec((1, extra, tile), lambda b, t: (0, 0, t)),
            ],
            out_specs=pl.BlockSpec((1, C_out, tile), lambda b, t: (b, 0, t)),
        ),
        compiler_params=pltpu.CompilerParams(
            dimension_semantics=("parallel", "parallel"),
            vmem_limit_bytes=32 * 1024 * 1024,   # raise v5e's 16 MiB default; = default on v6e/v7x
        ),
        cost_estimate=pl.CostEstimate(
            flops=0, transcendentals=0, bytes_accessed=int(bytes_accessed)),
    )(x_flat, coords)

    return out_flat.reshape(B, C_out, H, W)


def _reference_add_coords(x: jnp.ndarray, with_r: bool = False) -> jnp.ndarray:
    """Pure-JAX reference mirroring the PyTorch code (for verification)."""
    B, C, H, W = x.shape
    xx = jnp.arange(H, dtype=jnp.float32)[:, None] / (H - 1) * 2.0 - 1.0
    yy = jnp.arange(W, dtype=jnp.float32)[None, :] / (W - 1) * 2.0 - 1.0
    xx = jnp.broadcast_to(xx, (H, W))
    yy = jnp.broadcast_to(yy, (H, W))
    xx_c = jnp.broadcast_to(xx[None, None], (B, 1, H, W)).astype(x.dtype)
    yy_c = jnp.broadcast_to(yy[None, None], (B, 1, H, W)).astype(x.dtype)
    out = jnp.concatenate([x, xx_c, yy_c], axis=1)
    if with_r:
        rr = jnp.sqrt((xx_c - 0.5) ** 2 + (yy_c - 0.5) ** 2)
        out = jnp.concatenate([out, rr], axis=1)
    return out


if __name__ == "__main__":
    key = jax.random.PRNGKey(0)

    # Small test matching the module's expected NCHW input.
    B, C, H, W = 2, 4, 16, 16
    x = jax.random.normal(key, (B, C, H, W), dtype=jnp.float32)

    # with_r=False (module default)
    out = jax.block_until_ready(add_coords(x, with_r=False))
    ref = _reference_add_coords(x, with_r=False)
    assert out.shape == (B, C + 2, H, W), out.shape
    assert jnp.allclose(out, ref, atol=1e-6), "mismatch vs reference (with_r=False)"

    # with_r=True variant
    out_r = jax.block_until_ready(add_coords(x, with_r=True))
    ref_r = _reference_add_coords(x, with_r=True)
    assert out_r.shape == (B, C + 3, H, W), out_r.shape
    assert jnp.allclose(out_r, ref_r, atol=1e-6), "mismatch vs reference (with_r=True)"

    # Exercise the multi-tile path (H*W > lane tile, including a partial last
    # tile) to validate the tiled/masked-edge code path as well.
    key2 = jax.random.PRNGKey(1)
    x_big = jax.random.normal(key2, (1, 8, 96, 96), dtype=jnp.float32)  # HW = 9216 > 8192
    out_big = jax.block_until_ready(add_coords(x_big, with_r=False))
    ref_big = _reference_add_coords(x_big, with_r=False)
    assert out_big.shape == (1, 10, 96, 96), out_big.shape
    assert jnp.allclose(out_big, ref_big, atol=1e-6), "mismatch vs reference (tiled path)"

    print("KERNEL_OK")
</pallas_src>

<mosaic_0001>
module attributes {stable_mosaic.version = 11 : i64} {
  func.func @_addcoords_concat_kernel(%arg0: i32, %arg1: i32, %arg2: memref<1x4x256xf32, #tpu.memory_space<vmem>>, %arg3: memref<1x2x256xf32, #tpu.memory_space<vmem>>, %arg4: memref<1x6x256xf32, #tpu.memory_space<vmem>>) attributes {dimension_semantics = [#tpu.dimension_semantics<parallel>, #tpu.dimension_semantics<parallel>], iteration_bounds = array<i64: 2, 1>, scalar_prefetch = 0 : i64, scratch_operands = 0 : i64, tpu.core_type = #tpu.core_type<tc>, window_params = [{transform_indices = @transform_0, window_bounds = array<i64: 1, 4, 256>}, {transform_indices = @transform_1, window_bounds = array<i64: 1, 2, 256>}, {transform_indices = @transform_2, window_bounds = array<i64: 1, 6, 256>}]} {
    %c0 = arith.constant 0 : index
    %c0_0 = arith.constant 0 : index
    %c0_1 = arith.constant 0 : index
    %0 = vector.load %arg2[%c0, %c0_0, %c0_1] : memref<1x4x256xf32, #tpu.memory_space<vmem>>, vector<1x4x256xf32>
    %c0_2 = arith.constant 0 : index
    %c0_3 = arith.constant 0 : index
    %c0_4 = arith.constant 0 : index
    %1 = vector.load %arg4[%c0_2, %c0_3, %c0_4] : memref<1x6x256xf32, #tpu.memory_space<vmem>>, vector<1x4x256xf32>
    tpu.vector_store %arg4[%c0_2, %c0_3, %c0_4], %0 {strides = array<i32>} : memref<1x6x256xf32, #tpu.memory_space<vmem>>, vector<1x4x256xf32>,
    %c0_5 = arith.constant 0 : index
    %c0_6 = arith.constant 0 : index
    %c0_7 = arith.constant 0 : index
    %2 = vector.load %arg3[%c0_5, %c0_6, %c0_7] : memref<1x2x256xf32, #tpu.memory_space<vmem>>, vector<1x2x256xf32>
    %c0_8 = arith.constant 0 : index
    %c4 = arith.constant 4 : index
    %c0_9 = arith.constant 0 : index
    %3 = vector.load %arg4[%c0_8, %c4, %c0_9] : memref<1x6x256xf32, #tpu.memory_space<vmem>>, vector<1x2x256xf32>
    tpu.vector_store %arg4[%c0_8, %c4, %c0_9], %2 {strides = array<i32>} : memref<1x6x256xf32, #tpu.memory_space<vmem>>, vector<1x2x256xf32>,
    return
  }
  func.func @transform_0(%arg0: i32, %arg1: i32) -> (i32, i32, i32) {
    %c0_i32 = arith.constant 0 : i32
    %c0_i32_0 = arith.constant 0 : i32
    return %arg0, %c0_i32, %arg1 : i32, i32, i32
  }
  func.func @transform_1(%arg0: i32, %arg1: i32) -> (i32, i32, i32) {
    %c0_i32 = arith.constant 0 : i32
    %c0_i32_0 = arith.constant 0 : i32
    %c0_i32_1 = arith.constant 0 : i32
    return %c0_i32, %c0_i32_0, %arg1 : i32, i32, i32
  }
  func.func @transform_2(%arg0: i32, %arg1: i32) -> (i32, i32, i32) {
    %c0_i32 = arith.constant 0 : i32
    %c0_i32_0 = arith.constant 0 : i32
    return %arg0, %c0_i32, %arg1 : i32, i32, i32
  }
}

</mosaic_0001>

<llo_original>
// kernel: tpu_custom_call.1
$region0: #{tpu_custom_call.1}
  #allocation0 [shape = 'u32[]', space=smem, size = 0x4, offset = 0x4, fixed_abs, tag = 'smem constant byte address 0x4 - core index']
  #allocation1 [shape = 'u32[72,128]{1,0:T(1,128)}', space=vmem, size = 0x9000, scoped, tag = 'internal scratch']
  %s0 = inlined_call_operand.hbm [shape: f32[2,4,256], index: 0, kind: input, shape index: {}]
  %s1 = inlined_call_operand.hbm [shape: f32[1,2,256], index: 1, kind: input, shape index: {}]
  %s2 = inlined_call_operand.vmem [shape: f32[2,6,256], index: 2, kind: output, shape index: {}]
  %s3 = sld [smem:[#allocation0]]
  $region49: #{tpu_custom_call.1} parent=0
    _
  %s5 = ssub.s32 1, %s3
  %s6 = scalar_select 0, %s5, %s3
  $region1: #{tpu_custom_call.1} parent=0
    #allocation2 [shape = 'u8[8192]{0}', space=vmem, size = 0x2000, scoped, tag = 'input window, operand 0']
    #allocation3 [shape = 's32[2]{0}', space=sflag, size = 0x8, scoped, tag = 'scoped memory for tpu_custom_call.1']
    #allocation4 [shape = 'u8[2048]{0}', space=vmem, size = 0x800, scoped, tag = 'input window, operand 1, single buffered']
    #allocation5 [shape = 's32[1]{0}', space=sflag, size = 0x4, scoped, tag = 'scoped memory for tpu_custom_call.1']
    %7 = vsyncpa [#allocation3], 0
    %s8 = scalar_lea.sflag [#allocation3], 1
    %9 = vsyncpa %s8, 0
    %10 = vsyncpa [#allocation5], 0
    loop: start=0, step=1, limit=4
    $region2: #{tpu_custom_call.1} parent=1 // loop_pre_header
      _
    $region3: #{tpu_custom_call.1} parent=1 // loop_header
      %s12 = sphi 0, %s16
      %p13 = scmp.ge.s32.totalorder %s12, 4
      %s19 = sphi 0, %s31
      %s20 = sphi 0, %s27
      %s21 = sphi 0, %s19
      %s22 = sphi 0, %s20
      %s23 = sphi 0, %s21
      %s24 = sphi 0, %s22
      %s36 = sphi 0, %s38
      %s39 = sphi 0, %s36
      %s40 = sphi 0, %s39
      %s56 = sphi 0, %s40
      %s62 = sphi 0, %s64
      %s65 = sphi 0, %s62
      %s66 = sphi 0, %s65
      %s82 = sphi 0, %s66
      %s90 = sphi 0, %s92
      %s93 = sphi 0, %s90
      %s94 = sphi 0, %s93
      %s110 = sphi 0, %s94
    $region4: #{tpu_custom_call.1} parent=1 // loop_header_branch
      %15 = sbr.rel (%p13) target = $region8
    $region5: #{tpu_custom_call.1} parent=1 // loop_body
      %s17 = ssub.s32 %s12, 1
      %s18 = ssub.s32 %s12, 2
      %s25 = sadd.s32 1, %s20
      %p26 = scmp.ge.s32.totalorder %s25, 1
      %s27 = scalar_select %p26, 0, %s25
      %s28 = sadd.s32 1, %s19
      %s29 = scalar_select %p26, %s28, %s19
      %p30 = scmp.ge.s32.totalorder %s29, 2
      %s31 = scalar_select %p30, 0, %s29
      %s32 = ssub.s32 %s19, %s31
      %s33 = ssub.s32 %s20, %s27
      %s34 = sor.u32 %s32, %s33
      %p35 = scmp.eq.s32.totalorder %s34, 0
      %s37 = sadd.s32 %s36, 1
      %s38 = scalar_select %p35, %s36, %s37
      %p41 = pneg %p35
      %p42 = scmp.eq.s32.totalorder %s12, 1
      %p43 = por %p41, %p42
      %p44 = scmp.ne.s32.totalorder %s36, %s39
      %p45 = scmp.eq.s32.totalorder %s12, 0
      %p46 = por %p44, %p45
      %p47 = scmp.ne.s32.totalorder %s36, %s39
      %p48 = scmp.eq.s32.totalorder %s17, 1
      %p49 = por %p47, %p48
      %p50 = scmp.ne.s32.totalorder %s39, %s40
      %p51 = scmp.eq.s32.totalorder %s17, 0
      %p52 = por %p50, %p51
      %p53 = scmp.ne.s32.totalorder %s39, %s40
      %p54 = scmp.eq.s32.totalorder %s18, 1
      %p55 = por %p53, %p54
      %p57 = scmp.ne.s32.totalorder %s40, %s56
      %p58 = scmp.eq.s32.totalorder %s18, 0
      %p59 = por %p57, %p58
      %s60 = ssub.s32 %s20, %s27
      %p61 = scmp.eq.s32.totalorder %s60, 0
      %s63 = sadd.s32 %s62, 1
      %s64 = scalar_select %p61, %s62, %s63
      %p67 = pneg %p61
      %p68 = scmp.eq.s32.totalorder %s12, 1
      %p69 = por %p67, %p68
      %p70 = scmp.ne.s32.totalorder %s62, %s65
      %p71 = scmp.eq.s32.totalorder %s12, 0
      %p72 = por %p70, %p71
      %p73 = scmp.ne.s32.totalorder %s62, %s65
      %p74 = scmp.eq.s32.totalorder %s17, 1
      %p75 = por %p73, %p74
      %p76 = scmp.ne.s32.totalorder %s65, %s66
      %p77 = scmp.eq.s32.totalorder %s17, 0
      %p78 = por %p76, %p77
      %p79 = scmp.ne.s32.totalorder %s65, %s66
      %p80 = scmp.eq.s32.totalorder %s18, 1
      %p81 = por %p79, %p80
      %p83 = scmp.ne.s32.totalorder %s66, %s82
      %p84 = scmp.eq.s32.totalorder %s18, 0
      %p85 = por %p83, %p84
      %s86 = ssub.s32 %s19, %s31
      %s87 = ssub.s32 %s20, %s27
      %s88 = sor.u32 %s86, %s87
      %p89 = scmp.eq.s32.totalorder %s88, 0
      %s91 = sadd.s32 %s90, 1
      %s92 = scalar_select %p89, %s90, %s91
      %p95 = pneg %p89
      %p96 = scmp.eq.s32.totalorder %s12, 1
      %p97 = por %p95, %p96
      %p98 = scmp.ne.s32.totalorder %s90, %s93
      %p99 = scmp.eq.s32.totalorder %s12, 0
      %p100 = por %p98, %p99
      %p101 = scmp.ne.s32.totalorder %s90, %s93
      %p102 = scmp.eq.s32.totalorder %s17, 1
      %p103 = por %p101, %p102
      %p104 = scmp.ne.s32.totalorder %s93, %s94
      %p105 = scmp.eq.s32.totalorder %s17, 0
      %p106 = por %p104, %p105
      %p107 = scmp.ne.s32.totalorder %s93, %s94
      %p108 = scmp.eq.s32.totalorder %s18, 1
      %p109 = por %p107, %p108
      %p111 = scmp.ne.s32.totalorder %s94, %s110
      %p112 = scmp.eq.s32.totalorder %s18, 0
      %p113 = por %p111, %p112
      %p114 = scmp.le.s32.totalorder 1, %s12
      %p115 = scmp.lt.s32.totalorder %s12, 3
      %p116 = pnand %p114, %p115
      %p117 = pneg %p116
      // Predicated region
      $region9: #{tpu_custom_call.1} parent=5 // pred_check
        _
      $region10: #{tpu_custom_call.1} parent=5 // pred_check_branch
        %119 = sbr.rel (%p116) target = $region12
      $region11: #{tpu_custom_call.1} parent=5 // pred_region
        %s120 = ssub.s32 %s12, 1
        // Predicated region
        $region13: #{tpu_custom_call.1} parent=11 // pred_check
          %p121 = pneg %p78
        $region14: #{tpu_custom_call.1} parent=11 // pred_check_branch
          %123 = sbr.rel (%p121) target = $region16
        $region15: #{tpu_custom_call.1} parent=11 // pred_region
          %s124 = smul.u32 2, %s22
          %126 = vsyncadd [#allocation5], 0
          %s127 = smul.addr %s124, 2
          %s128 = scalar_lea.hbm %s1, %s127
          %s130 = sshll.u32 %s128, 4
          %s131 = int_to_ptr.hbm [resolvable:$true] %s130
          %s132 = sshll.u32 [#allocation4], 4
          %s133 = int_to_ptr.vmem [resolvable:$true] %s132
          %135 = dma.hbm_to_vmem [thread:$0]  %s131, 64, %s133, [#allocation5]
        $region16: #{tpu_custom_call.1} parent=11 // pred_fallthru
          _
      $region12: #{tpu_custom_call.1} parent=5 // pred_fallthru
        _
      %p136 = scmp.lt.s32.totalorder %s12, 2
      // Predicated region
      $region17: #{tpu_custom_call.1} parent=5 // pred_check
        %p137 = pneg %p136
      $region18: #{tpu_custom_call.1} parent=5 // pred_check_branch
        %139 = sbr.rel (%p137) target = $region20
      $region19: #{tpu_custom_call.1} parent=5 // pred_region
        // Predicated region
        $region21: #{tpu_custom_call.1} parent=19 // pred_check
          %p140 = pneg %p46
        $region22: #{tpu_custom_call.1} parent=19 // pred_check_branch
          %142 = sbr.rel (%p140) target = $region24
        $region23: #{tpu_custom_call.1} parent=19 // pred_region
          %s143 = sand.u32 %s36, 1
          %s144 = scalar_lea.sflag [#allocation3], %s143
          %s145 = sand.u32 %s36, 1
          %s146 = smul.addr %s145, 8
          %s147 = scalar_lea.vmem [#allocation2], %s146
          %s148 = smul.u32 2, %s20
          %150 = vsyncadd %s144, 0
          %s151 = smul.addr %s19, 2
          %s152 = sadd.s32 %s148, %s151
          %s153 = smul.addr %s152, 4
          %s154 = scalar_lea.hbm %s0, %s153
          %s156 = sshll.u32 %s154, 4
          %s157 = int_to_ptr.hbm [resolvable:$true] %s156
          %s158 = sshll.u32 %s147, 4
          %s159 = int_to_ptr.vmem [resolvable:$true] %s158
          %161 = dma.hbm_to_vmem [thread:$0]  %s157, 128, %s159, %s144
        $region24: #{tpu_custom_call.1} parent=19 // pred_fallthru
          _
      $region20: #{tpu_custom_call.1} parent=5 // pred_fallthru
        _
      %p162 = scmp.le.s32.totalorder 1, %s12
      %p163 = scmp.lt.s32.totalorder %s12, 3
      %p164 = pnand %p162, %p163
      %p165 = pneg %p164
      // Predicated region
      $region25: #{tpu_custom_call.1} parent=5 // pred_check
        _
      $region26: #{tpu_custom_call.1} parent=5 // pred_check_branch
        %167 = sbr.rel (%p164) target = $region28
      $region27: #{tpu_custom_call.1} parent=5 // pred_region
        %s168 = ssub.s32 %s12, 1
        %s169 = sand.u32 %s39, 1
        %s170 = scalar_lea.sflag [#allocation3], %s169
        %s171 = sand.u32 %s39, 1
        %s172 = smul.addr %s171, 8
        %s173 = scalar_lea.vmem [#allocation2], %s172
        // Predicated region
        $region29: #{tpu_custom_call.1} parent=27 // pred_check
          %p174 = pneg %p52
        $region30: #{tpu_custom_call.1} parent=27 // pred_check_branch
          %176 = sbr.rel (%p174) target = $region32
        $region31: #{tpu_custom_call.1} parent=27 // pred_region
          %178 = dma.done %s170, 128
        $region32: #{tpu_custom_call.1} parent=27 // pred_fallthru
          _
        // Predicated region
        $region33: #{tpu_custom_call.1} parent=27 // pred_check
          %p179 = pneg %p78
        $region34: #{tpu_custom_call.1} parent=27 // pred_check_branch
          %181 = sbr.rel (%p179) target = $region36
        $region35: #{tpu_custom_call.1} parent=27 // pred_region
          %183 = dma.done [#allocation5], 64
        $region36: #{tpu_custom_call.1} parent=27 // pred_fallthru
          _
        %s184 = sand.u32 %s39, 1
        %s185 = scalar_lea.sflag [#allocation3], %s184
        %s186 = sand.u32 %s39, 1
        %s187 = smul.addr %s186, 8
        %s188 = scalar_lea.vmem [#allocation2], %s187
        %p189 = pneg %p52
        %p190 = pneg %p49
        %p191 = pneg %p78
        %p192 = pneg %p75
        %p193 = pneg %p106
        %p194 = pneg %p103
        %s195 = smul.u32 2, %s22
        %p196 = scmp.lt.s32.totalorder %s21, 1
        %s197 = scalar_select %p196, %s21, 1
        %p198 = scmp.lt.s32.totalorder %s195, 1
        %s199 = scalar_select %p198, %s195, 1
        %s200 = smul.addr %s197, 2
        %s201 = sadd.s32 %s199, %s200
        %s202 = smul.addr %s201, 8
        %s203 = scalar_lea.vmem %s2, %s202
        %s204 = smul.u32 2, %s22
        %s205 = smul.u32 2, %s22
        %s206 = smul.u32 2, %s22
        %p207 = scmp.lt.s32.totalorder %s21, 1
        %s208 = scalar_select %p207, %s21, 1
        %p209 = scmp.lt.s32.totalorder %s206, 1
        %s210 = scalar_select %p209, %s206, 1
        %s211 = smul.addr %s208, 2
        %s212 = sadd.s32 %s210, %s211
        %s213 = smul.addr %s212, 8
        %s214 = scalar_lea.vmem %s2, %s213
        %s215 = smul.u32 2, %s22
        %v216 = vld [vmem:[%s173] sm:$0xff]
        %218 = vst [vmem:[#allocation1] ss:$2 sm:$0xff] %v216
        %v219 = vld.sshfl [vmem:[#allocation1] sm:$0xff pattern:$0x75316420]
        %v220 = vld.sshfl [vmem:[#allocation1 + $0x8] sm:$0xff pattern:$0x75316420]
        %223 = vst [vmem:[%s214] sm:$0xf] %v219
        %224 = vst [vmem:[%s214 + $0x8] sm:$0xf] %v220
        %v225 = vld [vmem:[#allocation4] sm:$0xf]
        %s227 = scalar_lea.vmem [#allocation1], 2
        %228 = vst [vmem:[%s227] ss:$4 sm:$0xff] %v225
        %v229 = vld.sshfl [vmem:[#allocation1] sm:$0xff pattern:$0x73625140]
        %v230 = vld.sshfl [vmem:[#allocation1 + $0x8] sm:$0xff pattern:$0x73625140]
        %233 = vst [vmem:[%s214] sm:$0x30] %v229
        %234 = vst [vmem:[%s214 + $0x8] sm:$0x30] %v230
        %s235 = smul.u32 2, %s22
        %p236 = scmp.lt.s32.totalorder %s21, 1
        %s237 = scalar_select %p236, %s21, 1
        %p238 = scmp.lt.s32.totalorder %s235, 1
        %s239 = scalar_select %p238, %s235, 1
        %s240 = smul.addr %s237, 2
        %s241 = sadd.s32 %s239, %s240
        %s242 = smul.addr %s241, 8
        %s243 = scalar_lea.vmem %s2, %s242
        // Predicated region
        $region37: #{tpu_custom_call.1} parent=27 // pred_check
          %p244 = pneg %p103
        $region38: #{tpu_custom_call.1} parent=27 // pred_check_branch
          %246 = sbr.rel (%p244) target = $region40
        $region39: #{tpu_custom_call.1} parent=27 // pred_region
          %s247 = smul.u32 2, %s22
        $region40: #{tpu_custom_call.1} parent=27 // pred_fallthru
          _
      $region28: #{tpu_custom_call.1} parent=5 // pred_fallthru
        _
      %p248 = scmp.le.s32.totalorder 2, %s12
      // Predicated region
      $region41: #{tpu_custom_call.1} parent=5 // pred_check
        %p249 = pneg %p248
      $region42: #{tpu_custom_call.1} parent=5 // pred_check_branch
        %251 = sbr.rel (%p249) target = $region44
      $region43: #{tpu_custom_call.1} parent=5 // pred_region
        %s252 = ssub.s32 %s12, 2
        // Predicated region
        $region45: #{tpu_custom_call.1} parent=43 // pred_check
          %p253 = pneg %p109
        $region46: #{tpu_custom_call.1} parent=43 // pred_check_branch
          %255 = sbr.rel (%p253) target = $region48
        $region47: #{tpu_custom_call.1} parent=43 // pred_region
          %s256 = smul.u32 2, %s24
          %p257 = scmp.lt.s32.totalorder %s23, 1
          %s258 = scalar_select %p257, %s23, 1
          %p259 = scmp.lt.s32.totalorder %s256, 1
          %s260 = scalar_select %p259, %s256, 1
          %s261 = smul.addr %s258, 2
          %s262 = sadd.s32 %s260, %s261
          %s263 = smul.addr %s262, 8
          %s264 = scalar_lea.vmem %s2, %s263
        $region48: #{tpu_custom_call.1} parent=43 // pred_fallthru
          _
      $region44: #{tpu_custom_call.1} parent=5 // pred_fallthru
        _
    $region6: #{tpu_custom_call.1} parent=1 // loop_footer
      %s16 = sadd.s32 1, %s12
    $region7: #{tpu_custom_call.1} parent=1 // loop_footer_branch
      %11 = sbr.rel target = $region3
    $region8: #{tpu_custom_call.1} parent=1 // loop_exit
      _
    %265 = vsyncpa [#allocation3], 1
    %s266 = scalar_lea.sflag [#allocation3], 1
    %267 = vsyncpa %s266, 1
    %268 = vsyncpa [#allocation5], 1

</llo_original>
